<compile_context>
chip_gen: v5e
topology: v5e:2x2
jax: 0.10.0
libtpu: 0.0.40
codegen_flags: <defaults>
</compile_context>

<pallas_src>
import math

import jax
import jax.numpy as jnp
from jax.experimental import pallas as pl
from jax.experimental.pallas import tpu as pltpu


def _round_up(a, m):
    return (a + m - 1) // m * m


def lstm_cell_kernel(x_ref, wx_ref, zh_ref, c_ref, h_out_ref, c_out_ref):
    """One row tile of the single-step LSTM cell.

    x_ref  : (TM, I)      streamed input rows (matmul dtype)
    wx_ref : (I, 4*Hp)    pre-transposed input->gate weights (resident)
    zh_ref : (TM, 4*Hp)   hoisted recurrent term hidden@Wh^T + (bx+bh) (resident)
    c_ref  : (TM, Hp)     initial cell state replicated over the row tile (resident)
    """
    hp = c_ref.shape[-1]

    # (TM, 4*Hp) gate pre-activations: one MXU matmul + resident recurrent term.
    z = jnp.dot(x_ref[...], wx_ref[...],
                preferred_element_type=jnp.float32) + zh_ref[...]

    # Gate slabs are Hp-wide -> every slice boundary is lane-aligned.
    i = jax.nn.sigmoid(z[:, 0 * hp:1 * hp])
    f = jax.nn.sigmoid(z[:, 1 * hp:2 * hp])
    g = jnp.tanh(z[:, 2 * hp:3 * hp])
    o = jax.nn.sigmoid(z[:, 3 * hp:4 * hp])

    c = c_ref[...]
    # NOTE: matches the reference module exactly (c = i*c + f*g, not f*c + i*g).
    c_new = i * c + f * g
    h_new = o * jnp.tanh(c_new)

    h_out_ref[...] = h_new
    c_out_ref[...] = c_new


def init_params(key, input_size, hidden_size):
    """Deterministic init mimicking torch.nn.Linear (uniform(-1/sqrt(fan_in), ...))."""
    names_x = ["ix", "fx", "gx", "ox"]
    names_h = ["ih", "fh", "gh", "oh"]
    params = {}
    keys = jax.random.split(key, 16)
    k = 0
    for n in names_x:
        bound = 1.0 / jnp.sqrt(input_size)
        params["w" + n] = jax.random.uniform(
            keys[k], (hidden_size, input_size), jnp.float32, -bound, bound); k += 1
        params["b" + n] = jax.random.uniform(
            keys[k], (hidden_size,), jnp.float32, -bound, bound); k += 1
    for n in names_h:
        bound = 1.0 / jnp.sqrt(hidden_size)
        params["w" + n] = jax.random.uniform(
            keys[k], (hidden_size, hidden_size), jnp.float32, -bound, bound); k += 1
        params["b" + n] = jax.random.uniform(
            keys[k], (hidden_size,), jnp.float32, -bound, bound); k += 1
    return params


def lstm_forward(x, hidden, c, params, *, matmul_dtype=jnp.float32,
                 target_rows=512):
    """x: (S, B, I); hidden, c: (B, H) -> (hidden_out, c_out) each (S, B, H)."""
    S, B, I = x.shape
    H = hidden.shape[-1]
    N = S * B

    f32 = jnp.float32
    Hp = _round_up(H, 128)        # lane-aligned per-gate width
    G = 4 * Hp                    # fused gate dimension

    # Row-tile size: multiple of 8 (sublanes) and of B (so the resident
    # (TM, ...) recurrent/cell replicas line up with batch index = row % B).
    step = math.lcm(8, B)
    tm = _round_up(min(target_rows, max(N, 1)), step)
    Np = _round_up(N, tm)

    # ---- weight prep (done once in XLA; kernel sees lane-major (K, 4*Hp)) ----
    def pad_gate_w(w):            # (H, K) -> (K, Hp), transposed + zero padded
        K = w.shape[1]
        wp = jnp.zeros((Hp, K), f32).at[:H, :].set(w.astype(f32))
        return wp.T

    wx_p = jnp.concatenate(
        [pad_gate_w(params["wix"]), pad_gate_w(params["wfx"]),
         pad_gate_w(params["wgx"]), pad_gate_w(params["wox"])], axis=1)   # (I, G)
    wh_p = jnp.concatenate(
        [pad_gate_w(params["wih"]), pad_gate_w(params["wfh"]),
         pad_gate_w(params["wgh"]), pad_gate_w(params["woh"])], axis=1)   # (H, G)

    def pad_b(b):
        return jnp.zeros((Hp,), f32).at[:H].set(b.astype(f32))

    b_p = jnp.concatenate(
        [pad_b(params["bix"] + params["bih"]),
         pad_b(params["bfx"] + params["bfh"]),
         pad_b(params["bgx"] + params["bgh"]),
         pad_b(params["box"] + params["boh"])])[None, :]                  # (1, G)

    # ---- hoisted recurrent path: computed once, not once per row ----
    zh = hidden.astype(f32) @ wh_p + b_p                                  # (B, G)
    zh_tile = jnp.tile(zh, (tm // B, 1))                                  # (tm, G)

    c_pad = jnp.zeros((B, Hp), f32).at[:, :H].set(c.astype(f32))
    c_tile = jnp.tile(c_pad, (tm // B, 1))                                # (tm, Hp)

    # ---- streamed input rows (padded to a whole number of tiles) ----
    x2 = jnp.zeros((Np, I), matmul_dtype).at[:N, :].set(
        x.reshape(N, I).astype(matmul_dtype))
    wx_p = wx_p.astype(matmul_dtype)

    # VMEM budget: resident weights/recurrent blocks + double-buffered tiles.
    itemsize = jnp.dtype(matmul_dtype).itemsize
    approx_vmem = (wx_p.size * itemsize
                   + zh_tile.size * 4 + c_tile.size * 4
                   + 2 * tm * I * itemsize
                   + 2 * 2 * tm * Hp * 4)
    vmem_limit = int(min(64 * 2**20, max(32 * 2**20, 2 * approx_vmem)))

    grid = (Np // tm,)

    h_out, c_out = pl.pallas_call(
        lstm_cell_kernel,
        out_shape=(jax.ShapeDtypeStruct((Np, Hp), f32),
                   jax.ShapeDtypeStruct((Np, Hp), f32)),
        grid=grid,
        in_specs=[
            pl.BlockSpec((tm, I), lambda r: (r, 0)),     # x rows (streamed)
            pl.BlockSpec((I, G), lambda r: (0, 0)),      # Wx (resident)
            pl.BlockSpec((tm, G), lambda r: (0, 0)),     # zh replica (resident)
            pl.BlockSpec((tm, Hp), lambda r: (0, 0)),    # c replica (resident)
        ],
        out_specs=(pl.BlockSpec((tm, Hp), lambda r: (r, 0)),
                   pl.BlockSpec((tm, Hp), lambda r: (r, 0))),
        compiler_params=pltpu.CompilerParams(
            dimension_semantics=("parallel",),
            vmem_limit_bytes=vmem_limit),
    )(x2, wx_p, zh_tile, c_tile)

    h_out = h_out[:N, :H].reshape(S, B, H)
    c_out = c_out[:N, :H].reshape(S, B, H)
    return h_out, c_out


def lstm_reference(x, hidden, c, p):
    """Pure-JAX reference matching the PyTorch forward (for verification)."""
    lin = lambda v, w, b: v @ w.T + b
    i = jax.nn.sigmoid(lin(x, p["wix"], p["bix"]) + lin(hidden, p["wih"], p["bih"]))
    f = jax.nn.sigmoid(lin(x, p["wfx"], p["bfx"]) + lin(hidden, p["wfh"], p["bfh"]))
    g = jnp.tanh(lin(x, p["wgx"], p["bgx"]) + lin(hidden, p["wgh"], p["bgh"]))
    o = jax.nn.sigmoid(lin(x, p["wox"], p["box"]) + lin(hidden, p["woh"], p["boh"]))
    c_new = i * c + f * g
    h_new = o * jnp.tanh(c_new)
    return h_new, c_new


if __name__ == "__main__":
    batch_size = 1
    hidden_size = 6
    input_size = 2
    seq_size = 5

    key = jax.random.PRNGKey(0)
    params = init_params(key, input_size, hidden_size)

    x = jnp.ones((seq_size, batch_size, input_size), jnp.float32)
    hidden = jnp.ones((batch_size, hidden_size), jnp.float32)
    c = jnp.ones((batch_size, hidden_size), jnp.float32)

    h_ref, c_ref = lstm_reference(x, hidden, c, params)

    # f32 MXU path (tight check).
    h_out, c_out = lstm_forward(x, hidden, c, params, matmul_dtype=jnp.float32)
    jax.block_until_ready((h_out, c_out))
    assert h_out.shape == (seq_size, batch_size, hidden_size)
    assert c_out.shape == (seq_size, batch_size, hidden_size)
    assert jnp.allclose(h_out, h_ref, atol=1e-5, rtol=1e-5)
    assert jnp.allclose(c_out, c_ref, atol=1e-5, rtol=1e-5)

    # bf16 MXU inputs (v6e/v7x recommendation): f32 accumulation + f32 elementwise.
    h_bf, c_bf = lstm_forward(x, hidden, c, params, matmul_dtype=jnp.bfloat16)
    jax.block_until_ready((h_bf, c_bf))
    assert jnp.allclose(h_bf, h_ref, atol=5e-2, rtol=5e-2)
    assert jnp.allclose(c_bf, c_ref, atol=5e-2, rtol=5e-2)

    print("KERNEL_OK")
</pallas_src>

<mosaic_0001>
module attributes {stable_mosaic.version = 11 : i64} {
  func.func @lstm_cell_kernel(%arg0: i32, %arg1: memref<8x2xf32, #tpu.memory_space<vmem>>, %arg2: memref<2x512xf32, #tpu.memory_space<vmem>>, %arg3: memref<8x512xf32, #tpu.memory_space<vmem>>, %arg4: memref<8x128xf32, #tpu.memory_space<vmem>>, %arg5: memref<8x128xf32, #tpu.memory_space<vmem>>, %arg6: memref<8x128xf32, #tpu.memory_space<vmem>>) attributes {dimension_semantics = [#tpu.dimension_semantics<parallel>], iteration_bounds = array<i64: 1>, scalar_prefetch = 0 : i64, scratch_operands = 0 : i64, tpu.core_type = #tpu.core_type<tc>, window_params = [{transform_indices = @transform_0, window_bounds = array<i64: 8, 2>}, {pipeline_mode = #tpu.pipeline_mode<synchronous>, transform_indices = @transform_1, window_bounds = array<i64: 2, 512>}, {pipeline_mode = #tpu.pipeline_mode<synchronous>, transform_indices = @transform_2, window_bounds = array<i64: 8, 512>}, {pipeline_mode = #tpu.pipeline_mode<synchronous>, transform_indices = @transform_3, window_bounds = array<i64: 8, 128>}, {transform_indices = @transform_4, window_bounds = array<i64: 8, 128>}, {transform_indices = @transform_5, window_bounds = array<i64: 8, 128>}]} {
    %c0 = arith.constant 0 : index
    %c0_0 = arith.constant 0 : index
    %0 = vector.load %arg1[%c0, %c0_0] : memref<8x2xf32, #tpu.memory_space<vmem>>, vector<8x2xf32>
    %c0_1 = arith.constant 0 : index
    %c0_2 = arith.constant 0 : index
    %1 = vector.load %arg2[%c0_1, %c0_2] : memref<2x512xf32, #tpu.memory_space<vmem>>, vector<2x512xf32>
    %cst = arith.constant dense<0.000000e+00> : vector<8x512xf32>
    %2 = tpu.matmul %0, %1, %cst {dimension_numbers = #tpu.dot_dimension_numbers<[1], [0], [0], [1], [0, 0, 1, 1], [], []>} : vector<8x2xf32>, vector<2x512xf32>, vector<8x512xf32> -> vector<8x512xf32>
    %c0_3 = arith.constant 0 : index
    %c0_4 = arith.constant 0 : index
    %3 = vector.load %arg3[%c0_3, %c0_4] : memref<8x512xf32, #tpu.memory_space<vmem>>, vector<8x512xf32>
    %4 = arith.addf %2, %3 : vector<8x512xf32>
    %5 = vector.extract_strided_slice %4 {offsets = [0, 0], sizes = [8, 128], strides = [1, 1]} : vector<8x512xf32> to vector<8x128xf32>
    %6 = arith.negf %5 : vector<8x128xf32>
    %7 = math.exp %6 : vector<8x128xf32>
    %cst_5 = arith.constant 1.000000e+00 : f32
    %8 = vector.broadcast %cst_5 : f32 to vector<8x128xf32>
    %9 = arith.addf %8, %7 : vector<8x128xf32>
    %10 = arith.divf %8, %9 : vector<8x128xf32>
    %11 = vector.extract_strided_slice %4 {offsets = [0, 128], sizes = [8, 128], strides = [1, 1]} : vector<8x512xf32> to vector<8x128xf32>
    %12 = arith.negf %11 : vector<8x128xf32>
    %13 = math.exp %12 : vector<8x128xf32>
    %cst_6 = arith.constant 1.000000e+00 : f32
    %14 = vector.broadcast %cst_6 : f32 to vector<8x128xf32>
    %15 = arith.addf %14, %13 : vector<8x128xf32>
    %16 = arith.divf %14, %15 : vector<8x128xf32>
    %17 = vector.extract_strided_slice %4 {offsets = [0, 256], sizes = [8, 128], strides = [1, 1]} : vector<8x512xf32> to vector<8x128xf32>
    %18 = math.tanh %17 : vector<8x128xf32>
    %19 = vector.extract_strided_slice %4 {offsets = [0, 384], sizes = [8, 128], strides = [1, 1]} : vector<8x512xf32> to vector<8x128xf32>
    %20 = arith.negf %19 : vector<8x128xf32>
    %21 = math.exp %20 : vector<8x128xf32>
    %cst_7 = arith.constant 1.000000e+00 : f32
    %22 = vector.broadcast %cst_7 : f32 to vector<8x128xf32>
    %23 = arith.addf %22, %21 : vector<8x128xf32>
    %24 = arith.divf %22, %23 : vector<8x128xf32>
    %c0_8 = arith.constant 0 : index
    %c0_9 = arith.constant 0 : index
    %25 = vector.load %arg4[%c0_8, %c0_9] : memref<8x128xf32, #tpu.memory_space<vmem>>, vector<8x128xf32>
    %26 = arith.mulf %10, %25 : vector<8x128xf32>
    %27 = arith.mulf %16, %18 : vector<8x128xf32>
    %28 = arith.addf %26, %27 : vector<8x128xf32>
    %29 = math.tanh %28 : vector<8x128xf32>
    %30 = arith.mulf %24, %29 : vector<8x128xf32>
    %c0_10 = arith.constant 0 : index
    %c0_11 = arith.constant 0 : index
    %31 = vector.load %arg5[%c0_10, %c0_11] : memref<8x128xf32, #tpu.memory_space<vmem>>, vector<8x128xf32>
    tpu.vector_store %arg5[%c0_10, %c0_11], %30 {strides = array<i32>} : memref<8x128xf32, #tpu.memory_space<vmem>>, vector<8x128xf32>,
    %c0_12 = arith.constant 0 : index
    %c0_13 = arith.constant 0 : index
    %32 = vector.load %arg6[%c0_12, %c0_13] : memref<8x128xf32, #tpu.memory_space<vmem>>, vector<8x128xf32>
    tpu.vector_store %arg6[%c0_12, %c0_13], %28 {strides = array<i32>} : memref<8x128xf32, #tpu.memory_space<vmem>>, vector<8x128xf32>,
    return
  }
  func.func @transform_0(%arg0: i32) -> (i32, i32) {
    %c0_i32 = arith.constant 0 : i32
    %c0_i32_0 = arith.constant 0 : i32
    return %arg0, %c0_i32 : i32, i32
  }
  func.func @transform_1(%arg0: i32) -> (i32, i32) {
    %c0_i32 = arith.constant 0 : i32
    %c0_i32_0 = arith.constant 0 : i32
    %c0_i32_1 = arith.constant 0 : i32
    return %c0_i32, %c0_i32_0 : i32, i32
  }
  func.func @transform_2(%arg0: i32) -> (i32, i32) {
    %c0_i32 = arith.constant 0 : i32
    %c0_i32_0 = arith.constant 0 : i32
    %c0_i32_1 = arith.constant 0 : i32
    return %c0_i32, %c0_i32_0 : i32, i32
  }
  func.func @transform_3(%arg0: i32) -> (i32, i32) {
    %c0_i32 = arith.constant 0 : i32
    %c0_i32_0 = arith.constant 0 : i32
    %c0_i32_1 = arith.constant 0 : i32
    return %c0_i32, %c0_i32_0 : i32, i32
  }
  func.func @transform_4(%arg0: i32) -> (i32, i32) {
    %c0_i32 = arith.constant 0 : i32
    %c0_i32_0 = arith.constant 0 : i32
    return %arg0, %c0_i32 : i32, i32
  }
  func.func @transform_5(%arg0: i32) -> (i32, i32) {
    %c0_i32 = arith.constant 0 : i32
    %c0_i32_0 = arith.constant 0 : i32
    return %arg0, %c0_i32 : i32, i32
  }
}

</mosaic_0001>

<llo_original>
// kernel: tpu_custom_call.1
$region0: #{tpu_custom_call.1}
  #allocation0 [shape = 'u32[]', space=smem, size = 0x4, offset = 0x4, fixed_abs, tag = 'smem constant byte address 0x4 - core index']
  #allocation1 [shape = 'u32[72,128]{1,0:T(1,128)}', space=vmem, size = 0x9000, scoped, tag = 'internal scratch']
  %s0 = inlined_call_operand.vmem [shape: f32[8,2], index: 0, kind: input, shape index: {}]
  %s1 = inlined_call_operand.vmem [shape: f32[2,512], index: 1, kind: input, shape index: {}]
  %s2 = inlined_call_operand.hbm [shape: f32[8,512], index: 2, kind: input, shape index: {}]
  %s3 = inlined_call_operand.hbm [shape: f32[8,128], index: 3, kind: input, shape index: {}]
  %s4 = inlined_call_operand.hbm [shape: f32[8,128], index: 4, kind: output, shape index: {0}]
  %s5 = inlined_call_operand.hbm [shape: f32[8,128], index: 5, kind: output, shape index: {1}]
  %6 = xla_tuple %s4, %s5
  %s7 = sld [smem:[#allocation0]]
  $region42: #{tpu_custom_call.1} parent=0
    _
  %s9 = ssub.s32 1, %s7
  %s10 = scalar_select 0, %s9, %s7
  $region1: #{tpu_custom_call.1} parent=0
    #allocation2 [shape = 'u8[16384]{0}', space=vmem, size = 0x4000, scoped, tag = 'input window, operand 2, single buffered']
    #allocation3 [shape = 's32[1]{0}', space=sflag, size = 0x4, scoped, tag = 'scoped memory for tpu_custom_call.1']
    #allocation4 [shape = 's32[1]{0}', space=sflag, size = 0x4, scoped, tag = 'scoped memory for tpu_custom_call.1']
    #allocation5 [shape = 'u8[4096]{0}', space=vmem, size = 0x1000, scoped, tag = 'input window, operand 3, single buffered']
    #allocation6 [shape = 's32[1]{0}', space=sflag, size = 0x4, scoped, tag = 'scoped memory for tpu_custom_call.1']
    #allocation7 [shape = 'u8[4096]{0}', space=vmem, size = 0x1000, scoped, tag = 'output window, operand 0, single buffered']
    #allocation8 [shape = 'u8[4096]{0}', space=vmem, size = 0x1000, scoped, tag = 'output window, operand 1, single buffered']
    #allocation9 [shape = 's32[1]{0}', space=sflag, size = 0x4, scoped, tag = 'scoped memory for tpu_custom_call.1']
    %11 = vsyncpa [#allocation3], 0
    %12 = vsyncpa [#allocation6], 0
    %13 = vsyncpa [#allocation4], 0
    %14 = vsyncpa [#allocation9], 0
    // Predicated region
    $region2: #{tpu_custom_call.1} parent=1 // pred_check
      _
    $region3: #{tpu_custom_call.1} parent=1 // pred_check_branch
      %16 = sbr.rel (0) target = $region5
    $region4: #{tpu_custom_call.1} parent=1 // pred_region
      _
    $region5: #{tpu_custom_call.1} parent=1 // pred_fallthru
      _
    // Predicated region
    $region6: #{tpu_custom_call.1} parent=1 // pred_check
      _
    $region7: #{tpu_custom_call.1} parent=1 // pred_check_branch
      %18 = sbr.rel (0) target = $region9
    $region8: #{tpu_custom_call.1} parent=1 // pred_region
      _
    $region9: #{tpu_custom_call.1} parent=1 // pred_fallthru
      _
    // Predicated region
    $region10: #{tpu_custom_call.1} parent=1 // pred_check
      _
    $region11: #{tpu_custom_call.1} parent=1 // pred_check_branch
      %20 = sbr.rel (0) target = $region13
    $region12: #{tpu_custom_call.1} parent=1 // pred_region
      %22 = vsyncadd [#allocation3], 0
      %s24 = sshll.u32 %s2, 4
      %s25 = int_to_ptr.hbm [resolvable:$true] %s24
      %s26 = sshll.u32 [#allocation2], 4
      %s27 = int_to_ptr.vmem [resolvable:$true] %s26
      %29 = dma.hbm_to_vmem [thread:$0]  %s25, 512, %s27, [#allocation3]
    $region13: #{tpu_custom_call.1} parent=1 // pred_fallthru
      _
    // Predicated region
    $region14: #{tpu_custom_call.1} parent=1 // pred_check
      _
    $region15: #{tpu_custom_call.1} parent=1 // pred_check_branch
      %31 = sbr.rel (0) target = $region17
    $region16: #{tpu_custom_call.1} parent=1 // pred_region
      %33 = vsyncadd [#allocation6], 0
      %s35 = sshll.u32 %s3, 4
      %s36 = int_to_ptr.hbm [resolvable:$true] %s35
      %s37 = sshll.u32 [#allocation5], 4
      %s38 = int_to_ptr.vmem [resolvable:$true] %s37
      %40 = dma.hbm_to_vmem [thread:$0]  %s36, 128, %s38, [#allocation6]
    $region17: #{tpu_custom_call.1} parent=1 // pred_fallthru
      _
    // Predicated region
    $region18: #{tpu_custom_call.1} parent=1 // pred_check
      _
    $region19: #{tpu_custom_call.1} parent=1 // pred_check_branch
      %42 = sbr.rel (0) target = $region21
    $region20: #{tpu_custom_call.1} parent=1 // pred_region
      %44 = dma.done [#allocation3], 512
    $region21: #{tpu_custom_call.1} parent=1 // pred_fallthru
      _
    // Predicated region
    $region22: #{tpu_custom_call.1} parent=1 // pred_check
      _
    $region23: #{tpu_custom_call.1} parent=1 // pred_check_branch
      %46 = sbr.rel (0) target = $region25
    $region24: #{tpu_custom_call.1} parent=1 // pred_region
      %48 = dma.done [#allocation6], 128
    $region25: #{tpu_custom_call.1} parent=1 // pred_fallthru
      _
    %v49 = vld [vmem:[%s0] sm:$0xff]
    %v50 = vld [vmem:[%s1] sm:$0xff]
    %v51 = vld [vmem:[#allocation2] sm:$0xff]
    %v52 = vld [vmem:[#allocation2 + $0x8] sm:$0xff]
    %v53 = vld [vmem:[#allocation2 + $0x10] sm:$0xff]
    %v54 = vld [vmem:[#allocation2 + $0x18] sm:$0xff]
    %56 = vst [vmem:[#allocation1] ss:$4 sm:$0xff] %v50
    %v57 = vld.sshfl [vmem:[#allocation1] sm:$0xff pattern:$0x73625140]
    %v58 = vld.sshfl [vmem:[#allocation1 + $0x8] sm:$0xff pattern:$0x73625140]
    %v59 = vld.sshfl [vmem:[#allocation1 + $0x10] sm:$0xff pattern:$0x73625140]
    %v60 = vld.sshfl [vmem:[#allocation1 + $0x18] sm:$0xff pattern:$0x73625140]
    %vm61 = vcmask 15360
    %v63 = vsel %vm61, %v49, 0
    %vm65 = vcmask 1041408
    %v66 = vsel %vm65, %v57, 0
    %v68 = vsel %vm65, %v58, 0
    %v70 = vsel %vm65, %v59, 0
    %v72 = vsel %vm65, %v60, 0
    %74 = vmatpush.msra.mxu0 0.0
    %75 = vmatpush.msra.mxu0 0.0
    %76 = vmatpush.msra.mxu0 0.0
    %77 = vmatpush.msra.mxu0 0.0
    %78 = vmatpush.msra.mxu0 0.0
    %79 = vmatpush.msra.mxu0 0.0
    %80 = vmatpush.msra.mxu0 0.0
    %81 = vmatpush.msra.mxu0 0.0
    %82 = vmatpush.msra.mxu0 0.0
    %83 = vmatpush.msra.mxu0 0.0
    %84 = vmatpush.msra.mxu0 0.0
    %85 = vmatpush.msra.mxu0 0.0
    %86 = vmatpush.msra.mxu0 0.0
    %87 = vmatpush.msra.mxu0 0.0
    %88 = vmatpush.msra.mxu0 0.0
    %89 = vmatpush.msra.mxu0 %v66
    %90 = vmatmul.f32.gmra.mxu0 %v63
    %v91 = vpop.f32.mrf.mxu0
    %v92 = vadd.f32 %v51, %v91
    %93 = vdwg.mxu0
    %94 = vmatpush.msra.mxu0 0.0
    %95 = vmatpush.msra.mxu0 0.0
    %96 = vmatpush.msra.mxu0 0.0
    %97 = vmatpush.msra.mxu0 0.0
    %98 = vmatpush.msra.mxu0 0.0
    %99 = vmatpush.msra.mxu0 0.0
    %100 = vmatpush.msra.mxu0 0.0
    %101 = vmatpush.msra.mxu0 0.0
    %102 = vmatpush.msra.mxu0 0.0
    %103 = vmatpush.msra.mxu0 0.0
    %104 = vmatpush.msra.mxu0 0.0
    %105 = vmatpush.msra.mxu0 0.0
    %106 = vmatpush.msra.mxu0 0.0
    %107 = vmatpush.msra.mxu0 0.0
    %108 = vmatpush.msra.mxu0 0.0
    %109 = vmatpush.msra.mxu0 %v68
    %110 = vmatmul.f32.gmra.mxu0 %v63
    %v111 = vpop.f32.mrf.mxu0
    %v112 = vadd.f32 %v52, %v111
    %113 = vdwg.mxu0
    %114 = vmatpush.msra.mxu0 0.0
    %115 = vmatpush.msra.mxu0 0.0
    %116 = vmatpush.msra.mxu0 0.0
    %117 = vmatpush.msra.mxu0 0.0
    %118 = vmatpush.msra.mxu0 0.0
    %119 = vmatpush.msra.mxu0 0.0
    %120 = vmatpush.msra.mxu0 0.0
    %121 = vmatpush.msra.mxu0 0.0
    %122 = vmatpush.msra.mxu0 0.0
    %123 = vmatpush.msra.mxu0 0.0
    %124 = vmatpush.msra.mxu0 0.0
    %125 = vmatpush.msra.mxu0 0.0
    %126 = vmatpush.msra.mxu0 0.0
    %127 = vmatpush.msra.mxu0 0.0
    %128 = vmatpush.msra.mxu0 0.0
    %129 = vmatpush.msra.mxu0 %v70
    %130 = vmatmul.f32.gmra.mxu0 %v63
    %v131 = vpop.f32.mrf.mxu0
    %v132 = vadd.f32 %v53, %v131
    %133 = vdwg.mxu0
    %134 = vmatpush.msra.mxu0 0.0
    %135 = vmatpush.msra.mxu0 0.0
    %136 = vmatpush.msra.mxu0 0.0
    %137 = vmatpush.msra.mxu0 0.0
    %138 = vmatpush.msra.mxu0 0.0
    %139 = vmatpush.msra.mxu0 0.0
    %140 = vmatpush.msra.mxu0 0.0
    %141 = vmatpush.msra.mxu0 0.0
    %142 = vmatpush.msra.mxu0 0.0
    %143 = vmatpush.msra.mxu0 0.0
    %144 = vmatpush.msra.mxu0 0.0
    %145 = vmatpush.msra.mxu0 0.0
    %146 = vmatpush.msra.mxu0 0.0
    %147 = vmatpush.msra.mxu0 0.0
    %148 = vmatpush.msra.mxu0 0.0
    %149 = vmatpush.msra.mxu0 %v72
    %150 = vmatmul.f32.gmra.mxu0 %v63
    %v151 = vpop.f32.mrf.mxu0
    %v152 = vadd.f32 %v54, %v151
    %153 = vdwg.mxu0
    %v154 = vxor.u32 %v92, 2147483648
    %v155 = vmul.f32 %v154, 1.442695
    %v156 = vpow.pop %v155
    %v157 = vadd.f32 %v156, 1.0
    %v158 = vrcp.pop %v157
    %v159 = vmul.f32 %v157, %v158
    %v160 = vsub.f32 1.0, %v159
    %v161 = vmul.f32 %v158, %v160
    %v162 = vadd.f32 %v158, %v161
    %vm163 = vweird.f32 %v157
    %vm164 = vweird.f32 %v158
    %vm165 = vmor %vm163, %vm164
    %v166 = vsel %vm165, %v158, %v162
    %v167 = vand.u32 2147483647, %v157
    %vm168 = vcmp.eq.f32.partialorder %v167, 8.507059e+37
    %v169 = vand.u32 %v157, 2147483648
    %v170 = vor.u32 1.1754944e-38, %v169
    %v171 = vsel %vm168, %v170, %v166
    %v172 = vmul.f32 1.0, %v171
    %v173 = vxor.u32 %v112, 2147483648
    %v174 = vmul.f32 %v173, 1.442695
    %v175 = vpow.pop %v174
    %v176 = vadd.f32 %v175, 1.0
    %v177 = vrcp.pop %v176
    %v178 = vmul.f32 %v176, %v177
    %v179 = vsub.f32 1.0, %v178
    %v180 = vmul.f32 %v177, %v179
    %v181 = vadd.f32 %v177, %v180
    %vm182 = vweird.f32 %v176
    %vm183 = vweird.f32 %v177
    %vm184 = vmor %vm182, %vm183
    %v185 = vsel %vm184, %v177, %v181
    %v186 = vand.u32 2147483647, %v176
    %vm187 = vcmp.eq.f32.partialorder %v186, 8.507059e+37
    %v188 = vand.u32 %v176, 2147483648
    %v189 = vor.u32 1.1754944e-38, %v188
    %v190 = vsel %vm187, %v189, %v185
    %v191 = vmul.f32 1.0, %v190
    %v192 = vtanh.pop %v132
    %v193 = vxor.u32 %v152, 2147483648
    %v194 = vmul.f32 %v193, 1.442695
    %v195 = vpow.pop %v194
    %v196 = vadd.f32 %v195, 1.0
    %v197 = vrcp.pop %v196
    %v198 = vmul.f32 %v196, %v197
    %v199 = vsub.f32 1.0, %v198
    %v200 = vmul.f32 %v197, %v199
    %v201 = vadd.f32 %v197, %v200
    %vm202 = vweird.f32 %v196
    %vm203 = vweird.f32 %v197
    %vm204 = vmor %vm202, %vm203
    %v205 = vsel %vm204, %v197, %v201
    %v206 = vand.u32 2147483647, %v196
    %vm207 = vcmp.eq.f32.partialorder %v206, 8.507059e+37
    %v208 = vand.u32 %v196, 2147483648
    %v209 = vor.u32 1.1754944e-38, %v208
    %v210 = vsel %vm207, %v209, %v205
    %v211 = vmul.f32 1.0, %v210
    %v212 = vld [vmem:[#allocation5] sm:$0xff]
    %v213 = vmul.f32 %v172, %v212
    %v214 = vmul.f32 %v191, %v192
    %v215 = vadd.f32 %v213, %v214
    %v216 = vtanh.pop %v215
    %v217 = vmul.f32 %v211, %v216
    %218 = vst [vmem:[#allocation7] sm:$0xff] %v217
    %219 = vst [vmem:[#allocation8] sm:$0xff] %v215
    // Predicated region
    $region26: #{tpu_custom_call.1} parent=1 // pred_check
      _
    $region27: #{tpu_custom_call.1} parent=1 // pred_check_branch
      %221 = sbr.rel (0) target = $region29
    $region28: #{tpu_custom_call.1} parent=1 // pred_region
      %223 = vsyncadd [#allocation4], 0
      %s225 = sshll.u32 [#allocation7], 4
      %s226 = int_to_ptr.vmem [resolvable:$true] %s225
      %s227 = sshll.u32 %s4, 4
      %s228 = int_to_ptr.hbm [resolvable:$true] %s227
      %230 = dma.vmem_to_hbm [thread:$0]  %s226, 128, %s228, [#allocation4]
    $region29: #{tpu_custom_call.1} parent=1 // pred_fallthru
      _
    // Predicated region
    $region30: #{tpu_custom_call.1} parent=1 // pred_check
      _
    $region31: #{tpu_custom_call.1} parent=1 // pred_check_branch
      %232 = sbr.rel (0) target = $region33
    $region32: #{tpu_custom_call.1} parent=1 // pred_region
      %234 = vsyncadd [#allocation9], 0
      %s236 = sshll.u32 [#allocation8], 4
      %s237 = int_to_ptr.vmem [resolvable:$true] %s236
      %s238 = sshll.u32 %s5, 4
      %s239 = int_to_ptr.hbm [resolvable:$true] %s238
      %241 = dma.vmem_to_hbm [thread:$0]  %s237, 128, %s239, [#allocation9]
    $region33: #{tpu_custom_call.1} parent=1 // pred_fallthru
      _
    // Predicated region
    $region34: #{tpu_custom_call.1} parent=1 // pred_check
      _
    $region35: #{tpu_custom_call.1} parent=1 // pred_check_branch
      %243 = sbr.rel (0) target = $region37
    $region36: #{tpu_custom_call.1} parent=1 // pred_region
      %245 = dma.done [#allocation4], 128
    $region37: #{tpu_custom_call.1} parent=1 // pred_fallthru
      _
    // Predicated region
    $region38: #{tpu_custom_call.1} parent=1 // pred_check
      _
    $region39: #{tpu_custom_call.1} parent=1 // pred_check_branch
      %247 = sbr.rel (0) target = $region41
    $region40: #{tpu_custom_call.1} parent=1 // pred_region
      %249 = dma.done [#allocation9], 128
    $region41: #{tpu_custom_call.1} parent=1 // pred_fallthru
      _
    %250 = vsyncpa [#allocation3], 1
    %251 = vsyncpa [#allocation6], 1
    %252 = vsyncpa [#allocation4], 1
    %253 = vsyncpa [#allocation9], 1

</llo_original>
